<compile_context>
chip_gen: v5e
topology: v5e:2x2
jax: 0.10.0
libtpu: 0.0.40
codegen_flags: <defaults>
</compile_context>

<pallas_src>
import functools
import math

import jax
import jax.numpy as jnp
from jax.experimental import pallas as pl
from jax.experimental.pallas import tpu as pltpu


# ---------------------------------------------------------------------------
# VMEM budget: raise above the default scoped limit (16 MiB v5e / 32 MiB
# v6e+v7x) while keeping headroom under physical capacity (128 MiB v5e/v6e,
# 64 MiB per-TensorCore v7x).
# ---------------------------------------------------------------------------
def _default_vmem_limit_bytes():
    try:
        cap = int(pltpu.get_tpu_info().vmem_capacity_bytes)
    except Exception:
        cap = 64 * 1024 * 1024  # conservative fallback (v7x-sized)
    return int(min(cap * 3 // 4, 100 * 1024 * 1024))


_VMEM_LIMIT_BYTES = _default_vmem_limit_bytes()


# ---------------------------------------------------------------------------
# Tiled linear: y = x @ W + b
#   x: [M, d_in]   W: [d_in, d_out]   b: [d_out]
# Grid: (d_out tiles, M tiles) with the M axis innermost, so the weight-column
# block stays VMEM-resident while x / out tiles stream.  Native-dtype MXU
# operands, f32 accumulation (preferred_element_type), f32 bias epilogue.
# ---------------------------------------------------------------------------
def _linear_kernel(x_ref, w_ref, b_ref, o_ref):
    acc = jnp.dot(x_ref[...], w_ref[...], preferred_element_type=jnp.float32)
    o_ref[...] = (acc + b_ref[...].astype(jnp.float32)).astype(o_ref.dtype)


def _linear_call(x2d, w, b2d, *, tm, tn, single_buffer_weights):
    M, d_in = x2d.shape
    d_out = w.shape[1]
    TM = min(tm, M)
    TN = min(tn, d_out)
    n_col = pl.cdiv(d_out, TN)
    n_row = pl.cdiv(M, TM)

    # Weight / bias blocks are constant along the streaming (inner) M axis:
    # double-buffering them only doubles their VMEM footprint without hiding
    # any DMA, so request a single buffer.
    spec_kwargs = {"pipeline_mode": pl.Buffered(1)} if single_buffer_weights else {}

    itemsize = x2d.dtype.itemsize
    cost = pl.CostEstimate(
        flops=int(2 * M * d_in * d_out),
        transcendentals=0,
        bytes_accessed=int(
            (M * d_in * n_col + d_in * d_out + d_out + M * d_out) * itemsize),
    )

    return pl.pallas_call(
        _linear_kernel,
        out_shape=jax.ShapeDtypeStruct((M, d_out), x2d.dtype),
        grid_spec=pltpu.PrefetchScalarGridSpec(
            num_scalar_prefetch=0,
            grid=(n_col, n_row),  # M axis innermost -> weight block stays put
            in_specs=[
                pl.BlockSpec((TM, d_in), lambda j, i: (i, 0)),               # x tile
                pl.BlockSpec((d_in, TN), lambda j, i: (0, j), **spec_kwargs),  # W cols
                pl.BlockSpec((1, TN), lambda j, i: (0, j), **spec_kwargs),     # bias
            ],
            out_specs=pl.BlockSpec((TM, TN), lambda j, i: (i, j)),
        ),
        compiler_params=pltpu.CompilerParams(
            dimension_semantics=("parallel", "parallel"),
            vmem_limit_bytes=_VMEM_LIMIT_BYTES),
        cost_estimate=cost,
    )(x2d, w, b2d)


def linear(x2d, w, b, *, tm=512, tn=512):
    # Defaults sized for v6e/v7x; on v5e prefer tm=256.
    b2d = b.reshape(1, -1)
    try:
        return _linear_call(x2d, w, b2d, tm=tm, tn=tn, single_buffer_weights=True)
    except Exception:
        # pipeline_mode=pl.Buffered(1) unavailable in this JAX/Mosaic build:
        # fall back to default double-buffering (correct, slightly more VMEM).
        return _linear_call(x2d, w, b2d, tm=tm, tn=tn, single_buffer_weights=False)


# ---------------------------------------------------------------------------
# Scaled dot-product attention: all heads of one batch element per grid step.
# Inputs / output are [B, L, n_cols*d_model] slabs; the Q/K/V column block is
# selected by the BlockSpec index_map (col = 0 for standalone projections,
# 0/1/2 for the fused QKV slab).  Head split / concat are therefore pure
# layout indexing, and the output store is lane-dense (last dim = d_model).
# ---------------------------------------------------------------------------
def _attention_kernel(q_ref, k_ref, v_ref, o_ref, *, n_head, scale):
    d_model = q_ref.shape[-1]
    d_t = d_model // n_head

    q = q_ref[0] * scale          # fold 1/sqrt(d_t) into the (TQ, d_model) tile
    k = k_ref[0]                  # (Lk, d_model), resident for this batch elem
    v = v_ref[0]

    head_out = []
    for h in range(n_head):       # static unroll; all heads share the VMEM block
        lo = h * d_t
        qh = q[:, lo:lo + d_t]
        kh = k[:, lo:lo + d_t]
        vh = v[:, lo:lo + d_t]

        # scores: (TQ, Lk), f32 accumulation on the MXU
        s = jax.lax.dot_general(qh, kh, (((1,), (1,)), ((), ())),
                                preferred_element_type=jnp.float32)
        # numerically stable softmax over the full (resident) key length
        m = jnp.max(s, axis=-1, keepdims=True)
        p = jnp.exp(s - m)
        l = jnp.sum(p, axis=-1, keepdims=True)

        o = jnp.dot(p.astype(vh.dtype), vh, preferred_element_type=jnp.float32)
        o = o * pl.reciprocal(l, approx=True)     # EUP divide, effectively free
        head_out.append(o.astype(o_ref.dtype))

    # concat heads -> single lane-dense (TQ, d_model) store
    o_ref[0] = jnp.concatenate(head_out, axis=-1)


def scaled_dot_product_attention(q_arr, k_arr, v_arr, *, n_head, d_model,
                                 q_col=0, k_col=0, v_col=0, tq=256):
    # TQ default 256 for v6e/v7x (2x256^2 MXU); prefer 128 on v5e.
    B, Lq, _ = q_arr.shape
    Lk = k_arr.shape[1]
    TQ = min(tq, Lq)
    d_t = d_model // n_head

    def q_map(col):
        return lambda b, i: (b, i, col)

    def kv_map(col):
        return lambda b, i: (b, 0, col)

    itemsize = q_arr.dtype.itemsize
    cost = pl.CostEstimate(
        flops=int(4 * B * Lq * Lk * d_model),
        transcendentals=int(B * n_head * Lq * Lk),
        bytes_accessed=int((2 * B * Lq * d_model + 2 * B * Lk * d_model) * itemsize),
    )

    kernel = functools.partial(_attention_kernel, n_head=n_head,
                               scale=1.0 / math.sqrt(d_t))
    return pl.pallas_call(
        kernel,
        out_shape=jax.ShapeDtypeStruct((B, Lq, d_model), q_arr.dtype),
        grid_spec=pltpu.PrefetchScalarGridSpec(
            num_scalar_prefetch=0,
            grid=(B, pl.cdiv(Lq, TQ)),
            in_specs=[
                pl.BlockSpec((1, TQ, d_model), q_map(q_col)),    # streamed q tile
                pl.BlockSpec((1, Lk, d_model), kv_map(k_col)),   # resident K / batch
                pl.BlockSpec((1, Lk, d_model), kv_map(v_col)),   # resident V / batch
            ],
            out_specs=pl.BlockSpec((1, TQ, d_model), lambda b, i: (b, i, 0)),
        ),
        compiler_params=pltpu.CompilerParams(
            dimension_semantics=("parallel", "parallel"),
            vmem_limit_bytes=_VMEM_LIMIT_BYTES),
        cost_estimate=cost,
    )(q_arr, k_arr, v_arr)


# ---------------------------------------------------------------------------
# Full MultiHeadAttention forward (mask=None).
# Weights are stored [in_features, out_features] (transpose of nn.Linear).
# ---------------------------------------------------------------------------
def multi_head_attention(q, k, v, params, n_head):
    (w_q, b_q, w_k, b_k, w_v, b_v, w_o, b_o) = params
    B, Lq, d_model = q.shape
    Lk = k.shape[1]
    assert d_model % n_head == 0
    Mq = B * Lq

    # Self-attention: fuse the three projections (x read from HBM once) and let
    # attention pick the Q/K/V column blocks of the fused slab via index_maps.
    fuse_qkv = (q is k) and (k is v) and (d_model % 128 == 0)

    if fuse_qkv:
        # Weight concat is a one-time, weight-sized op (hoist/cache in real use).
        w_qkv = jnp.concatenate([w_q, w_k, w_v], axis=1)   # [d_model, 3*d_model]
        b_qkv = jnp.concatenate([b_q, b_k, b_v], axis=0)   # [3*d_model]
        qkv = linear(q.reshape(Mq, d_model), w_qkv, b_qkv)
        qkv = qkv.reshape(B, Lq, 3 * d_model)
        oh = scaled_dot_product_attention(qkv, qkv, qkv, n_head=n_head,
                                          d_model=d_model,
                                          q_col=0, k_col=1, v_col=2)
    else:
        qp = linear(q.reshape(Mq, d_model), w_q, b_q).reshape(B, Lq, d_model)
        kp = linear(k.reshape(B * Lk, d_model), w_k, b_k).reshape(B, Lk, d_model)
        vp = linear(v.reshape(B * Lk, d_model), w_v, b_v).reshape(B, Lk, d_model)
        oh = scaled_dot_product_attention(qp, kp, vp, n_head=n_head,
                                          d_model=d_model)

    # concat-of-heads is already the memory layout of `oh` -> free reshape.
    out = linear(oh.reshape(Mq, d_model), w_o, b_o)
    return out.reshape(B, Lq, d_model)


# ---------------------------------------------------------------------------
# Reference (plain JAX) for correctness checking.
# ---------------------------------------------------------------------------
def reference_mha(q, k, v, params, n_head):
    (w_q, b_q, w_k, b_k, w_v, b_v, w_o, b_o) = params
    B, L, d_model = q.shape
    d_t = d_model // n_head

    def lin(x, w, b):
        return x @ w + b

    def split(t):
        return t.reshape(B, L, n_head, d_t).transpose(0, 2, 1, 3)

    qh = split(lin(q, w_q, b_q))
    kh = split(lin(k, w_k, b_k))
    vh = split(lin(v, w_v, b_v))

    s = (qh @ kh.transpose(0, 1, 3, 2)) / math.sqrt(d_t)
    p = jax.nn.softmax(s, axis=-1)
    o = (p @ vh).transpose(0, 2, 1, 3).reshape(B, L, d_model)
    return lin(o, w_o, b_o)


if __name__ == "__main__":
    # d_model = 128 keeps every BlockSpec last dim a 128-multiple (lane-dense).
    B, L, d_model, n_head = 2, 8, 128, 4

    key = jax.random.PRNGKey(0)
    ks = jax.random.split(key, 11)

    q_in = jax.random.normal(ks[0], (B, L, d_model), jnp.float32)
    k_in = jax.random.normal(ks[1], (B, L, d_model), jnp.float32)
    v_in = jax.random.normal(ks[2], (B, L, d_model), jnp.float32)

    # PyTorch-nn.Linear-style uniform init; weights stored [in, out].
    bound = 1.0 / math.sqrt(d_model)

    def uni(kk, shape):
        return jax.random.uniform(kk, shape, jnp.float32, -bound, bound)

    w_q, b_q = uni(ks[3], (d_model, d_model)), uni(ks[4], (d_model,))
    w_k, b_k = uni(ks[5], (d_model, d_model)), uni(ks[6], (d_model,))
    w_v, b_v = uni(ks[7], (d_model, d_model)), uni(ks[8], (d_model,))
    w_o, b_o = uni(ks[9], (d_model, d_model)), uni(ks[10], (d_model,))
    params = (w_q, b_q, w_k, b_k, w_v, b_v, w_o, b_o)

    # 1) general path (distinct q / k / v -> separate projection kernels)
    out = jax.block_until_ready(
        multi_head_attention(q_in, k_in, v_in, params, n_head))
    ref = reference_mha(q_in, k_in, v_in, params, n_head)
    assert out.shape == (B, L, d_model)
    err = jnp.max(jnp.abs(out - ref))
    assert jnp.allclose(out, ref, atol=5e-3, rtol=5e-3), \
        f"general path max abs err {err}"

    # 2) self-attention path (q is k is v -> fused QKV projection kernel)
    out_s = jax.block_until_ready(
        multi_head_attention(q_in, q_in, q_in, params, n_head))
    ref_s = reference_mha(q_in, q_in, q_in, params, n_head)
    err_s = jnp.max(jnp.abs(out_s - ref_s))
    assert jnp.allclose(out_s, ref_s, atol=5e-3, rtol=5e-3), \
        f"fused path max abs err {err_s}"

    print("KERNEL_OK")
</pallas_src>

<mosaic_0001>
module attributes {stable_mosaic.version = 11 : i64} {
  func.func @_linear_kernel(%arg0: i32, %arg1: i32, %arg2: memref<16x128xf32, #tpu.memory_space<vmem>>, %arg3: memref<128x128xf32, #tpu.memory_space<vmem>>, %arg4: memref<1x128xf32, #tpu.memory_space<vmem>>, %arg5: memref<16x128xf32, #tpu.memory_space<vmem>>) attributes {dimension_semantics = [#tpu.dimension_semantics<parallel>, #tpu.dimension_semantics<parallel>], iteration_bounds = array<i64: 1, 1>, scalar_prefetch = 0 : i64, scratch_operands = 0 : i64, tpu.core_type = #tpu.core_type<tc>, window_params = [{transform_indices = @transform_0, window_bounds = array<i64: 16, 128>}, {pipeline_mode = #tpu.pipeline_mode<synchronous>, transform_indices = @transform_1, window_bounds = array<i64: 128, 128>}, {pipeline_mode = #tpu.pipeline_mode<synchronous>, transform_indices = @transform_2, window_bounds = array<i64: 1, 128>}, {transform_indices = @transform_3, window_bounds = array<i64: 16, 128>}]} {
    %c0 = arith.constant 0 : index
    %c0_0 = arith.constant 0 : index
    %0 = vector.load %arg2[%c0, %c0_0] : memref<16x128xf32, #tpu.memory_space<vmem>>, vector<16x128xf32>
    %c0_1 = arith.constant 0 : index
    %c0_2 = arith.constant 0 : index
    %1 = vector.load %arg3[%c0_1, %c0_2] : memref<128x128xf32, #tpu.memory_space<vmem>>, vector<128x128xf32>
    %cst = arith.constant dense<0.000000e+00> : vector<16x128xf32>
    %2 = tpu.matmul %0, %1, %cst {dimension_numbers = #tpu.dot_dimension_numbers<[1], [0], [0], [1], [0, 0, 1, 1], [], []>} : vector<16x128xf32>, vector<128x128xf32>, vector<16x128xf32> -> vector<16x128xf32>
    %c0_3 = arith.constant 0 : index
    %c0_4 = arith.constant 0 : index
    %3 = vector.load %arg4[%c0_3, %c0_4] : memref<1x128xf32, #tpu.memory_space<vmem>>, vector<1x128xf32>
    %4 = vector.broadcast %3 : vector<1x128xf32> to vector<16x128xf32>
    %5 = arith.addf %2, %4 : vector<16x128xf32>
    %c0_5 = arith.constant 0 : index
    %c0_6 = arith.constant 0 : index
    %6 = vector.load %arg5[%c0_5, %c0_6] : memref<16x128xf32, #tpu.memory_space<vmem>>, vector<16x128xf32>
    tpu.vector_store %arg5[%c0_5, %c0_6], %5 {strides = array<i32>} : memref<16x128xf32, #tpu.memory_space<vmem>>, vector<16x128xf32>,
    return
  }
  func.func @transform_0(%arg0: i32, %arg1: i32) -> (i32, i32) {
    %c0_i32 = arith.constant 0 : i32
    %c0_i32_0 = arith.constant 0 : i32
    return %arg1, %c0_i32 : i32, i32
  }
  func.func @transform_1(%arg0: i32, %arg1: i32) -> (i32, i32) {
    %c0_i32 = arith.constant 0 : i32
    %c0_i32_0 = arith.constant 0 : i32
    return %c0_i32, %arg0 : i32, i32
  }
  func.func @transform_2(%arg0: i32, %arg1: i32) -> (i32, i32) {
    %c0_i32 = arith.constant 0 : i32
    %c0_i32_0 = arith.constant 0 : i32
    return %c0_i32, %arg0 : i32, i32
  }
  func.func @transform_3(%arg0: i32, %arg1: i32) -> (i32, i32) {
    %c0_i32 = arith.constant 0 : i32
    return %arg1, %arg0 : i32, i32
  }
}

module attributes {stable_mosaic.version = 11 : i64} {
  func.func @_linear_kernel(%arg0: i32, %arg1: i32, %arg2: memref<16x128xf32, #tpu.memory_space<vmem>>, %arg3: memref<128x128xf32, #tpu.memory_space<vmem>>, %arg4: memref<1x128xf32, #tpu.memory_space<vmem>>, %arg5: memref<16x128xf32, #tpu.memory_space<vmem>>) attributes {dimension_semantics = [#tpu.dimension_semantics<parallel>, #tpu.dimension_semantics<parallel>], iteration_bounds = array<i64: 1, 1>, scalar_prefetch = 0 : i64, scratch_operands = 0 : i64, tpu.core_type = #tpu.core_type<tc>, window_params = [{transform_indices = @transform_0, window_bounds = array<i64: 16, 128>}, {transform_indices = @transform_1, window_bounds = array<i64: 128, 128>}, {transform_indices = @transform_2, window_bounds = array<i64: 1, 128>}, {transform_indices = @transform_3, window_bounds = array<i64: 16, 128>}]} {
    %c0 = arith.constant 0 : index
    %c0_0 = arith.constant 0 : index
    %0 = vector.load %arg2[%c0, %c0_0] : memref<16x128xf32, #tpu.memory_space<vmem>>, vector<16x128xf32>
    %c0_1 = arith.constant 0 : index
    %c0_2 = arith.constant 0 : index
    %1 = vector.load %arg3[%c0_1, %c0_2] : memref<128x128xf32, #tpu.memory_space<vmem>>, vector<128x128xf32>
    %cst = arith.constant dense<0.000000e+00> : vector<16x128xf32>
    %2 = tpu.matmul %0, %1, %cst {dimension_numbers = #tpu.dot_dimension_numbers<[1], [0], [0], [1], [0, 0, 1, 1], [], []>} : vector<16x128xf32>, vector<128x128xf32>, vector<16x128xf32> -> vector<16x128xf32>
    %c0_3 = arith.constant 0 : index
    %c0_4 = arith.constant 0 : index
    %3 = vector.load %arg4[%c0_3, %c0_4] : memref<1x128xf32, #tpu.memory_space<vmem>>, vector<1x128xf32>
    %4 = vector.broadcast %3 : vector<1x128xf32> to vector<16x128xf32>
    %5 = arith.addf %2, %4 : vector<16x128xf32>
    %c0_5 = arith.constant 0 : index
    %c0_6 = arith.constant 0 : index
    %6 = vector.load %arg5[%c0_5, %c0_6] : memref<16x128xf32, #tpu.memory_space<vmem>>, vector<16x128xf32>
    tpu.vector_store %arg5[%c0_5, %c0_6], %5 {strides = array<i32>} : memref<16x128xf32, #tpu.memory_space<vmem>>, vector<16x128xf32>,
    return
  }
  func.func @transform_0(%arg0: i32, %arg1: i32) -> (i32, i32) {
    %c0_i32 = arith.constant 0 : i32
    %c0_i32_0 = arith.constant 0 : i32
    return %arg1, %c0_i32 : i32, i32
  }
  func.func @transform_1(%arg0: i32, %arg1: i32) -> (i32, i32) {
    %c0_i32 = arith.constant 0 : i32
    %c0_i32_0 = arith.constant 0 : i32
    return %c0_i32, %arg0 : i32, i32
  }
  func.func @transform_2(%arg0: i32, %arg1: i32) -> (i32, i32) {
    %c0_i32 = arith.constant 0 : i32
    %c0_i32_0 = arith.constant 0 : i32
    return %c0_i32, %arg0 : i32, i32
  }
  func.func @transform_3(%arg0: i32, %arg1: i32) -> (i32, i32) {
    %c0_i32 = arith.constant 0 : i32
    return %arg1, %arg0 : i32, i32
  }
}

</mosaic_0001>

<llo_original>
// kernel: tpu_custom_call.1
$region0: #{tpu_custom_call.1}
  #allocation0 [shape = 'u32[]', space=smem, size = 0x4, offset = 0x4, fixed_abs, tag = 'smem constant byte address 0x4 - core index']
  #allocation1 [shape = 'u32[72,128]{1,0:T(1,128)}', space=vmem, size = 0x9000, scoped, tag = 'internal scratch']
  %s0 = inlined_call_operand.hbm [shape: f32[16,128], index: 0, kind: input, shape index: {}]
  %s1 = inlined_call_operand.hbm [shape: f32[128,128], index: 1, kind: input, shape index: {}]
  %s2 = inlined_call_operand.vmem [shape: f32[1,128], index: 2, kind: input, shape index: {}]
  %s3 = inlined_call_operand.hbm [shape: f32[16,128], index: 3, kind: output, shape index: {}]
  %s4 = sld [smem:[#allocation0]]
  $region30: #{tpu_custom_call.1} parent=0
    _
  %s6 = ssub.s32 1, %s4
  %s7 = scalar_select 0, %s6, %s4
  $region1: #{tpu_custom_call.1} parent=0
    #allocation2 [shape = 'u8[8192]{0}', space=vmem, size = 0x2000, scoped, tag = 'input window, operand 0, single buffered']
    #allocation3 [shape = 's32[1]{0}', space=sflag, size = 0x4, scoped, tag = 'scoped memory for tpu_custom_call.1']
    #allocation4 [shape = 's32[1]{0}', space=sflag, size = 0x4, scoped, tag = 'scoped memory for tpu_custom_call.1']
    #allocation5 [shape = 'u8[65536]{0}', space=vmem, size = 0x10000, scoped, tag = 'input window, operand 1, single buffered']
    #allocation6 [shape = 's32[1]{0}', space=sflag, size = 0x4, scoped, tag = 'scoped memory for tpu_custom_call.1']
    #allocation7 [shape = 'u8[8192]{0}', space=vmem, size = 0x2000, scoped, tag = 'output window, operand 0, single buffered']
    %8 = vsyncpa [#allocation3], 0
    %9 = vsyncpa [#allocation6], 0
    %10 = vsyncpa [#allocation4], 0
    // Predicated region
    $region2: #{tpu_custom_call.1} parent=1 // pred_check
      _
    $region3: #{tpu_custom_call.1} parent=1 // pred_check_branch
      %12 = sbr.rel (0) target = $region5
    $region4: #{tpu_custom_call.1} parent=1 // pred_region
      %14 = vsyncadd [#allocation3], 0
      %s15 = sshll.u32 %s0, 4
      %s16 = int_to_ptr.hbm [resolvable:$true] %s15
      %s17 = sshll.u32 [#allocation2], 4
      %s18 = int_to_ptr.vmem [resolvable:$true] %s17
      %23 = dma.hbm_to_vmem [thread:$0]  %s16, 256, %s18, [#allocation3], 128, 128, 8
    $region5: #{tpu_custom_call.1} parent=1 // pred_fallthru
      _
    // Predicated region
    $region6: #{tpu_custom_call.1} parent=1 // pred_check
      _
    $region7: #{tpu_custom_call.1} parent=1 // pred_check_branch
      %25 = sbr.rel (0) target = $region9
    $region8: #{tpu_custom_call.1} parent=1 // pred_region
      %27 = vsyncadd [#allocation6], 0
      %s28 = sshll.u32 %s1, 4
      %s29 = int_to_ptr.hbm [resolvable:$true] %s28
      %s30 = sshll.u32 [#allocation5], 4
      %s31 = int_to_ptr.vmem [resolvable:$true] %s30
      %36 = dma.hbm_to_vmem [thread:$0]  %s29, 2048, %s31, [#allocation6], 128, 128, 8
    $region9: #{tpu_custom_call.1} parent=1 // pred_fallthru
      _
    // Predicated region
    $region10: #{tpu_custom_call.1} parent=1 // pred_check
      _
    $region11: #{tpu_custom_call.1} parent=1 // pred_check_branch
      %38 = sbr.rel (0) target = $region13
    $region12: #{tpu_custom_call.1} parent=1 // pred_region
      _
    $region13: #{tpu_custom_call.1} parent=1 // pred_fallthru
      _
    // Predicated region
    $region14: #{tpu_custom_call.1} parent=1 // pred_check
      _
    $region15: #{tpu_custom_call.1} parent=1 // pred_check_branch
      %40 = sbr.rel (0) target = $region17
    $region16: #{tpu_custom_call.1} parent=1 // pred_region
      %42 = dma.done [#allocation3], 256
    $region17: #{tpu_custom_call.1} parent=1 // pred_fallthru
      _
    // Predicated region
    $region18: #{tpu_custom_call.1} parent=1 // pred_check
      _
    $region19: #{tpu_custom_call.1} parent=1 // pred_check_branch
      %44 = sbr.rel (0) target = $region21
    $region20: #{tpu_custom_call.1} parent=1 // pred_region
      %46 = dma.done [#allocation6], 2048
    $region21: #{tpu_custom_call.1} parent=1 // pred_fallthru
      _
    %v47 = vld [vmem:[#allocation2] sm:$0xff]
    %v48 = vld [vmem:[#allocation2 + $0x8] sm:$0xff]
    %v49 = vld [vmem:[#allocation5] sm:$0xff]
    %v50 = vld [vmem:[#allocation5 + $0x8] sm:$0xff]
    %v51 = vld [vmem:[#allocation5 + $0x10] sm:$0xff]
    %v52 = vld [vmem:[#allocation5 + $0x18] sm:$0xff]
    %v53 = vld [vmem:[#allocation5 + $0x20] sm:$0xff]
    %v54 = vld [vmem:[#allocation5 + $0x28] sm:$0xff]
    %v55 = vld [vmem:[#allocation5 + $0x30] sm:$0xff]
    %v56 = vld [vmem:[#allocation5 + $0x38] sm:$0xff]
    %v57 = vld [vmem:[#allocation5 + $0x40] sm:$0xff]
    %v58 = vld [vmem:[#allocation5 + $0x48] sm:$0xff]
    %v59 = vld [vmem:[#allocation5 + $0x50] sm:$0xff]
    %v60 = vld [vmem:[#allocation5 + $0x58] sm:$0xff]
    %v61 = vld [vmem:[#allocation5 + $0x60] sm:$0xff]
    %v62 = vld [vmem:[#allocation5 + $0x68] sm:$0xff]
    %v63 = vld [vmem:[#allocation5 + $0x70] sm:$0xff]
    %v64 = vld [vmem:[#allocation5 + $0x78] sm:$0xff]
    %v65 = vld [vmem:[%s2] sm:$0x1]
    %v67 = vperm.slane %v65, 0
    %69 = vmatpush.msra.mxu0 %v64
    %70 = vmatpush.msra.mxu0 %v63
    %71 = vmatpush.msra.mxu0 %v62
    %72 = vmatpush.msra.mxu0 %v61
    %73 = vmatpush.msra.mxu0 %v60
    %74 = vmatpush.msra.mxu0 %v59
    %75 = vmatpush.msra.mxu0 %v58
    %76 = vmatpush.msra.mxu0 %v57
    %77 = vmatpush.msra.mxu0 %v56
    %78 = vmatpush.msra.mxu0 %v55
    %79 = vmatpush.msra.mxu0 %v54
    %80 = vmatpush.msra.mxu0 %v53
    %81 = vmatpush.msra.mxu0 %v52
    %82 = vmatpush.msra.mxu0 %v51
    %83 = vmatpush.msra.mxu0 %v50
    %84 = vmatpush.msra.mxu0 %v49
    %85 = vmatmul.f32.gmra.mxu0 %v47
    %v86 = vpop.f32.mrf.mxu0
    %v87 = vadd.f32 %v67, %v86
    %88 = vmatmul.f32.gmra.mxu0 %v48
    %v89 = vpop.f32.mrf.mxu0
    %v90 = vadd.f32 %v67, %v89
    %91 = vdwg.mxu0
    %92 = vst [vmem:[#allocation7] sm:$0xff] %v87
    %93 = vst [vmem:[#allocation7 + $0x8] sm:$0xff] %v90
    // Predicated region
    $region22: #{tpu_custom_call.1} parent=1 // pred_check
      _
    $region23: #{tpu_custom_call.1} parent=1 // pred_check_branch
      %95 = sbr.rel (0) target = $region25
    $region24: #{tpu_custom_call.1} parent=1 // pred_region
      %97 = vsyncadd [#allocation4], 0
      %s98 = sshll.u32 [#allocation7], 4
      %s99 = int_to_ptr.vmem [resolvable:$true] %s98
      %s100 = sshll.u32 %s3, 4
      %s101 = int_to_ptr.hbm [resolvable:$true] %s100
      %106 = dma.vmem_to_hbm [thread:$0]  %s99, 256, %s101, [#allocation4], 128, 128, 8
    $region25: #{tpu_custom_call.1} parent=1 // pred_fallthru
      _
    // Predicated region
    $region26: #{tpu_custom_call.1} parent=1 // pred_check
      _
    $region27: #{tpu_custom_call.1} parent=1 // pred_check_branch
      %108 = sbr.rel (0) target = $region29
    $region28: #{tpu_custom_call.1} parent=1 // pred_region
      %110 = dma.done [#allocation4], 256
    $region29: #{tpu_custom_call.1} parent=1 // pred_fallthru
      _
    %111 = vsyncpa [#allocation3], 1
    %112 = vsyncpa [#allocation6], 1
    %113 = vsyncpa [#allocation4], 1

// kernel: tpu_custom_call.1
$region0: #{tpu_custom_call.1}
  #allocation0 [shape = 'u32[]', space=smem, size = 0x4, offset = 0x4, fixed_abs, tag = 'smem constant byte address 0x4 - core index']
  #allocation1 [shape = 'u32[72,128]{1,0:T(1,128)}', space=vmem, size = 0x9000, scoped, tag = 'internal scratch']
  %s0 = inlined_call_operand.hbm [shape: f32[16,128], index: 0, kind: input, shape index: {}]
  %s1 = inlined_call_operand.hbm [shape: f32[128,128], index: 1, kind: input, shape index: {}]
  %s2 = inlined_call_operand.vmem [shape: f32[1,128], index: 2, kind: input, shape index: {}]
  %s3 = inlined_call_operand.hbm [shape: f32[16,128], index: 3, kind: output, shape index: {}]
  %s4 = sld [smem:[#allocation0]]
  $region30: #{tpu_custom_call.1} parent=0
    _
  %s6 = ssub.s32 1, %s4
  %s7 = scalar_select 0, %s6, %s4
  $region1: #{tpu_custom_call.1} parent=0
    #allocation2 [shape = 'u8[8192]{0}', space=vmem, size = 0x2000, scoped, tag = 'input window, operand 0, single buffered']
    #allocation3 [shape = 's32[1]{0}', space=sflag, size = 0x4, scoped, tag = 'scoped memory for tpu_custom_call.1']
    #allocation4 [shape = 's32[1]{0}', space=sflag, size = 0x4, scoped, tag = 'scoped memory for tpu_custom_call.1']
    #allocation5 [shape = 'u8[65536]{0}', space=vmem, size = 0x10000, scoped, tag = 'input window, operand 1, single buffered']
    #allocation6 [shape = 's32[1]{0}', space=sflag, size = 0x4, scoped, tag = 'scoped memory for tpu_custom_call.1']
    #allocation7 [shape = 'u8[8192]{0}', space=vmem, size = 0x2000, scoped, tag = 'output window, operand 0, single buffered']
    %8 = vsyncpa [#allocation3], 0
    %9 = vsyncpa [#allocation6], 0
    %10 = vsyncpa [#allocation4], 0
    // Predicated region
    $region2: #{tpu_custom_call.1} parent=1 // pred_check
      _
    $region3: #{tpu_custom_call.1} parent=1 // pred_check_branch
      %12 = sbr.rel (0) target = $region5
    $region4: #{tpu_custom_call.1} parent=1 // pred_region
      %14 = vsyncadd [#allocation3], 0
      %s15 = sshll.u32 %s0, 4
      %s16 = int_to_ptr.hbm [resolvable:$true] %s15
      %s17 = sshll.u32 [#allocation2], 4
      %s18 = int_to_ptr.vmem [resolvable:$true] %s17
      %23 = dma.hbm_to_vmem [thread:$0]  %s16, 256, %s18, [#allocation3], 128, 128, 8
    $region5: #{tpu_custom_call.1} parent=1 // pred_fallthru
      _
    // Predicated region
    $region6: #{tpu_custom_call.1} parent=1 // pred_check
      _
    $region7: #{tpu_custom_call.1} parent=1 // pred_check_branch
      %25 = sbr.rel (0) target = $region9
    $region8: #{tpu_custom_call.1} parent=1 // pred_region
      %27 = vsyncadd [#allocation6], 0
      %s28 = sshll.u32 %s1, 4
      %s29 = int_to_ptr.hbm [resolvable:$true] %s28
      %s30 = sshll.u32 [#allocation5], 4
      %s31 = int_to_ptr.vmem [resolvable:$true] %s30
      %36 = dma.hbm_to_vmem [thread:$0]  %s29, 2048, %s31, [#allocation6], 128, 128, 8
    $region9: #{tpu_custom_call.1} parent=1 // pred_fallthru
      _
    // Predicated region
    $region10: #{tpu_custom_call.1} parent=1 // pred_check
      _
    $region11: #{tpu_custom_call.1} parent=1 // pred_check_branch
      %38 = sbr.rel (0) target = $region13
    $region12: #{tpu_custom_call.1} parent=1 // pred_region
      _
    $region13: #{tpu_custom_call.1} parent=1 // pred_fallthru
      _
    // Predicated region
    $region14: #{tpu_custom_call.1} parent=1 // pred_check
      _
    $region15: #{tpu_custom_call.1} parent=1 // pred_check_branch
      %40 = sbr.rel (0) target = $region17
    $region16: #{tpu_custom_call.1} parent=1 // pred_region
      %42 = dma.done [#allocation3], 256
    $region17: #{tpu_custom_call.1} parent=1 // pred_fallthru
      _
    // Predicated region
    $region18: #{tpu_custom_call.1} parent=1 // pred_check
      _
    $region19: #{tpu_custom_call.1} parent=1 // pred_check_branch
      %44 = sbr.rel (0) target = $region21
    $region20: #{tpu_custom_call.1} parent=1 // pred_region
      %46 = dma.done [#allocation6], 2048
    $region21: #{tpu_custom_call.1} parent=1 // pred_fallthru
      _
    %v47 = vld [vmem:[#allocation2] sm:$0xff]
    %v48 = vld [vmem:[#allocation2 + $0x8] sm:$0xff]
    %v49 = vld [vmem:[#allocation5] sm:$0xff]
    %v50 = vld [vmem:[#allocation5 + $0x8] sm:$0xff]
    %v51 = vld [vmem:[#allocation5 + $0x10] sm:$0xff]
    %v52 = vld [vmem:[#allocation5 + $0x18] sm:$0xff]
    %v53 = vld [vmem:[#allocation5 + $0x20] sm:$0xff]
    %v54 = vld [vmem:[#allocation5 + $0x28] sm:$0xff]
    %v55 = vld [vmem:[#allocation5 + $0x30] sm:$0xff]
    %v56 = vld [vmem:[#allocation5 + $0x38] sm:$0xff]
    %v57 = vld [vmem:[#allocation5 + $0x40] sm:$0xff]
    %v58 = vld [vmem:[#allocation5 + $0x48] sm:$0xff]
    %v59 = vld [vmem:[#allocation5 + $0x50] sm:$0xff]
    %v60 = vld [vmem:[#allocation5 + $0x58] sm:$0xff]
    %v61 = vld [vmem:[#allocation5 + $0x60] sm:$0xff]
    %v62 = vld [vmem:[#allocation5 + $0x68] sm:$0xff]
    %v63 = vld [vmem:[#allocation5 + $0x70] sm:$0xff]
    %v64 = vld [vmem:[#allocation5 + $0x78] sm:$0xff]
    %v65 = vld [vmem:[%s2] sm:$0x1]
    %v67 = vperm.slane %v65, 0
    %69 = vmatpush.msra.mxu0 %v64
    %70 = vmatpush.msra.mxu0 %v63
    %71 = vmatpush.msra.mxu0 %v62
    %72 = vmatpush.msra.mxu0 %v61
    %73 = vmatpush.msra.mxu0 %v60
    %74 = vmatpush.msra.mxu0 %v59
    %75 = vmatpush.msra.mxu0 %v58
    %76 = vmatpush.msra.mxu0 %v57
    %77 = vmatpush.msra.mxu0 %v56
    %78 = vmatpush.msra.mxu0 %v55
    %79 = vmatpush.msra.mxu0 %v54
    %80 = vmatpush.msra.mxu0 %v53
    %81 = vmatpush.msra.mxu0 %v52
    %82 = vmatpush.msra.mxu0 %v51
    %83 = vmatpush.msra.mxu0 %v50
    %84 = vmatpush.msra.mxu0 %v49
    %85 = vmatmul.f32.gmra.mxu0 %v47
    %v86 = vpop.f32.mrf.mxu0
    %v87 = vadd.f32 %v67, %v86
    %88 = vmatmul.f32.gmra.mxu0 %v48
    %v89 = vpop.f32.mrf.mxu0
    %v90 = vadd.f32 %v67, %v89
    %91 = vdwg.mxu0
    %92 = vst [vmem:[#allocation7] sm:$0xff] %v87
    %93 = vst [vmem:[#allocation7 + $0x8] sm:$0xff] %v90
    // Predicated region
    $region22: #{tpu_custom_call.1} parent=1 // pred_check
      _
    $region23: #{tpu_custom_call.1} parent=1 // pred_check_branch
      %95 = sbr.rel (0) target = $region25
    $region24: #{tpu_custom_call.1} parent=1 // pred_region
      %97 = vsyncadd [#allocation4], 0
      %s98 = sshll.u32 [#allocation7], 4
      %s99 = int_to_ptr.vmem [resolvable:$true] %s98
      %s100 = sshll.u32 %s3, 4
      %s101 = int_to_ptr.hbm [resolvable:$true] %s100
      %106 = dma.vmem_to_hbm [thread:$0]  %s99, 256, %s101, [#allocation4], 128, 128, 8
    $region25: #{tpu_custom_call.1} parent=1 // pred_fallthru
      _
    // Predicated region
    $region26: #{tpu_custom_call.1} parent=1 // pred_check
      _
    $region27: #{tpu_custom_call.1} parent=1 // pred_check_branch
      %108 = sbr.rel (0) target = $region29
    $region28: #{tpu_custom_call.1} parent=1 // pred_region
      %110 = dma.done [#allocation4], 256
    $region29: #{tpu_custom_call.1} parent=1 // pred_fallthru
      _
    %111 = vsyncpa [#allocation3], 1
    %112 = vsyncpa [#allocation6], 1
    %113 = vsyncpa [#allocation4], 1

</llo_original>
